<compile_context>
chip_gen: v7x
topology: tpu7x:2x2x1
jax: 0.10.0
libtpu: 0.0.40
codegen_flags: <defaults>
</compile_context>

<pallas_src>
import jax
import jax.numpy as jnp
from jax import lax
from jax.experimental import pallas as pl
from jax.experimental.pallas import tpu as pltpu

# Static problem sizes implied by the module
N, CIN, H, W = 3, 1, 6, 6
COUT, KH, KW = 2, 2, 2
DIL = 3
HO = H - DIL * (KH - 1)   # 3
WO = W - DIL * (KW - 1)   # 3


def conv_sum_kernel(w_ref, x_ref, o_ref):
    # w_ref: (COUT*KH*KW,) f32 in SMEM -- raw OIHW conv weights flattened (8 scalars)
    # x_ref: (N, H*W) f32 in VMEM      -- flattened NCHW input (CIN == 1)
    # o_ref: (N, WO)  f32 in VMEM      -- v9 without the unit dims
    x = x_ref[...]

    acc = None
    for kh in range(KH):
        r0 = kh * DIL
        # Row (axis=2) reduction: column sums over the HO input rows this kernel-row
        # touches, shape (N, W).
        col = x[:, r0 * W:(r0 + 1) * W]
        for i in range(1, HO):
            col = col + x[:, (r0 + i) * W:(r0 + i + 1) * W]
        for kw in range(KW):
            # Channel (axis=1) reduction folded into the tap: sum over COUT using
            # scalar adds on the scalar slot (free -- it is idle here).
            tap = w_ref[kh * KW + kw]
            for c in range(1, COUT):
                tap = tap + w_ref[c * KH * KW + kh * KW + kw]
            term = col[:, kw * DIL: kw * DIL + WO] * tap    # scalar splat -> VPU mul, (N, WO)
            acc = term if acc is None else acc + term
    o_ref[...] = acc


def model_forward(x, weight):
    # x: (N, 1, H, W) f32, weight: (COUT, 1, KH, KW) f32 (OIHW, like torch Conv2d).
    # Wrapper does only metadata reshapes -- all arithmetic (including the channel fold)
    # happens inside the single Pallas call.
    wflat = weight.reshape(COUT * KH * KW)       # (8,)  -> SMEM scalars
    x2d = x.reshape(N, H * W)                    # (3, 36) -> single lane-dense slab
    out2d = pl.pallas_call(
        conv_sum_kernel,
        out_shape=jax.ShapeDtypeStruct((N, WO), jnp.float32),
        in_specs=[
            pl.BlockSpec(memory_space=pltpu.MemorySpace.SMEM),   # weights as scalars
            pl.BlockSpec(memory_space=pltpu.MemorySpace.VMEM),   # flattened input slab
        ],
        out_specs=pl.BlockSpec(memory_space=pltpu.MemorySpace.VMEM),
        # ~100 FLOPs, ~480 bytes touched: keep XLA's scheduler from being pessimistic.
        cost_estimate=pl.CostEstimate(flops=120, transcendentals=0, bytes_accessed=480),
    )(wflat, x2d)
    return out2d.reshape(N, 1, 1, WO)


def reference_forward(x, weight):
    v1 = lax.conv_general_dilated(
        x, weight, window_strides=(1, 1), padding="VALID",
        rhs_dilation=(DIL, DIL),
        dimension_numbers=("NCHW", "OIHW", "NCHW"))
    return v1.sum(axis=2, keepdims=True).sum(axis=1, keepdims=True)


if __name__ == "__main__":
    key = jax.random.PRNGKey(0)
    kx, kw = jax.random.split(key)
    x1 = jax.random.normal(kx, (N, CIN, H, W), dtype=jnp.float32)
    # Deterministic Conv2d weight, shape (out_ch=2, in_ch=1, 2, 2) like nn.Conv2d (OIHW)
    weight = jax.random.normal(kw, (COUT, CIN, KH, KW), dtype=jnp.float32) * 0.5

    out = model_forward(x1, weight)
    out = jax.block_until_ready(out)

    ref = reference_forward(x1, weight)
    assert out.shape == (N, 1, 1, WO), out.shape
    assert jnp.allclose(out, ref, atol=1e-5, rtol=1e-5), (out, ref)
    print("KERNEL_OK")
</pallas_src>

<mosaic_0001>
module attributes {stable_mosaic.version = 11 : i64} {
  func.func @conv_sum_kernel(%arg0: memref<8xf32, #tpu.memory_space<smem>>, %arg1: memref<3x36xf32, #tpu.memory_space<vmem>>, %arg2: memref<3x3xf32, #tpu.memory_space<vmem>>) attributes {dimension_semantics = [], scalar_prefetch = 0 : i64, scratch_operands = 0 : i64, tpu.core_type = #tpu.core_type<tc>} {
    %c0 = arith.constant 0 : index
    %c0_0 = arith.constant 0 : index
    %0 = vector.load %arg1[%c0, %c0_0] : memref<3x36xf32, #tpu.memory_space<vmem>>, vector<3x36xf32>
    %1 = vector.extract_strided_slice %0 {offsets = [0, 0], sizes = [3, 6], strides = [1, 1]} : vector<3x36xf32> to vector<3x6xf32>
    %2 = vector.extract_strided_slice %0 {offsets = [0, 6], sizes = [3, 6], strides = [1, 1]} : vector<3x36xf32> to vector<3x6xf32>
    %3 = arith.addf %1, %2 : vector<3x6xf32>
    %4 = vector.extract_strided_slice %0 {offsets = [0, 12], sizes = [3, 6], strides = [1, 1]} : vector<3x36xf32> to vector<3x6xf32>
    %5 = arith.addf %3, %4 : vector<3x6xf32>
    %c0_1 = arith.constant 0 : index
    %6 = memref.load %arg0[%c0_1] : memref<8xf32, #tpu.memory_space<smem>>
    %c4 = arith.constant 4 : index
    %7 = memref.load %arg0[%c4] : memref<8xf32, #tpu.memory_space<smem>>
    %8 = arith.addf %6, %7 : f32
    %9 = vector.extract_strided_slice %5 {offsets = [0, 0], sizes = [3, 3], strides = [1, 1]} : vector<3x6xf32> to vector<3x3xf32>
    %10 = vector.broadcast %8 : f32 to vector<3x3xf32>
    %11 = arith.mulf %9, %10 : vector<3x3xf32>
    %c1 = arith.constant 1 : index
    %12 = memref.load %arg0[%c1] : memref<8xf32, #tpu.memory_space<smem>>
    %c5 = arith.constant 5 : index
    %13 = memref.load %arg0[%c5] : memref<8xf32, #tpu.memory_space<smem>>
    %14 = arith.addf %12, %13 : f32
    %15 = vector.extract_strided_slice %5 {offsets = [0, 3], sizes = [3, 3], strides = [1, 1]} : vector<3x6xf32> to vector<3x3xf32>
    %16 = vector.broadcast %14 : f32 to vector<3x3xf32>
    %17 = arith.mulf %15, %16 : vector<3x3xf32>
    %18 = arith.addf %11, %17 : vector<3x3xf32>
    %19 = vector.extract_strided_slice %0 {offsets = [0, 18], sizes = [3, 6], strides = [1, 1]} : vector<3x36xf32> to vector<3x6xf32>
    %20 = vector.extract_strided_slice %0 {offsets = [0, 24], sizes = [3, 6], strides = [1, 1]} : vector<3x36xf32> to vector<3x6xf32>
    %21 = arith.addf %19, %20 : vector<3x6xf32>
    %22 = vector.extract_strided_slice %0 {offsets = [0, 30], sizes = [3, 6], strides = [1, 1]} : vector<3x36xf32> to vector<3x6xf32>
    %23 = arith.addf %21, %22 : vector<3x6xf32>
    %c2 = arith.constant 2 : index
    %24 = memref.load %arg0[%c2] : memref<8xf32, #tpu.memory_space<smem>>
    %c6 = arith.constant 6 : index
    %25 = memref.load %arg0[%c6] : memref<8xf32, #tpu.memory_space<smem>>
    %26 = arith.addf %24, %25 : f32
    %27 = vector.extract_strided_slice %23 {offsets = [0, 0], sizes = [3, 3], strides = [1, 1]} : vector<3x6xf32> to vector<3x3xf32>
    %28 = vector.broadcast %26 : f32 to vector<3x3xf32>
    %29 = arith.mulf %27, %28 : vector<3x3xf32>
    %30 = arith.addf %18, %29 : vector<3x3xf32>
    %c3 = arith.constant 3 : index
    %31 = memref.load %arg0[%c3] : memref<8xf32, #tpu.memory_space<smem>>
    %c7 = arith.constant 7 : index
    %32 = memref.load %arg0[%c7] : memref<8xf32, #tpu.memory_space<smem>>
    %33 = arith.addf %31, %32 : f32
    %34 = vector.extract_strided_slice %23 {offsets = [0, 3], sizes = [3, 3], strides = [1, 1]} : vector<3x6xf32> to vector<3x3xf32>
    %35 = vector.broadcast %33 : f32 to vector<3x3xf32>
    %36 = arith.mulf %34, %35 : vector<3x3xf32>
    %37 = arith.addf %30, %36 : vector<3x3xf32>
    %c0_2 = arith.constant 0 : index
    %c0_3 = arith.constant 0 : index
    %38 = vector.load %arg2[%c0_2, %c0_3] : memref<3x3xf32, #tpu.memory_space<vmem>>, vector<3x3xf32>
    tpu.vector_store %arg2[%c0_2, %c0_3], %37 {strides = array<i32>} : memref<3x3xf32, #tpu.memory_space<vmem>>, vector<3x3xf32>,
    return
  }
}

</mosaic_0001>

<llo_original>
// kernel: tpu_custom_call.1
$region0: #{tpu_custom_call.1}
  #allocation0 [shape = 'u32[]', space=smem, size = 0x4, offset = 0x4, fixed_abs, tag = 'smem constant byte address 0x4 - core index']
  #allocation1 [shape = 'u32[144,128]{1,0:T(1,128)}', space=vmem, size = 0x12000, scoped, tag = 'internal scratch']
  %s0 = inlined_call_operand.hbm [shape: f32[8], index: 0, kind: input, shape index: {}]
  %s1 = inlined_call_operand.hbm [shape: f32[3,36], index: 1, kind: input, shape index: {}]
  %s2 = inlined_call_operand.hbm [shape: f32[3,3], index: 2, kind: output, shape index: {}]
  %s3 = sld [smem:[#allocation0]]
  $region26: #{tpu_custom_call.1} parent=0
    _
  %s5 = ssub.s32 1, %s3
  %s6 = scalar_select 0, %s5, %s3
  $region1: #{tpu_custom_call.1} parent=0
    #allocation2 [shape = 'u8[512]{0}', space=smem, size = 0x200, scoped, tag = 'input window, operand 0, single buffered']
    #allocation3 [shape = 's32[1]{0}', space=sflag, size = 0x4, scoped, tag = 'scoped memory for tpu_custom_call.1']
    #allocation4 [shape = 's32[1]{0}', space=sflag, size = 0x4, scoped, tag = 'scoped memory for tpu_custom_call.1']
    #allocation5 [shape = 's32[1]{0}', space=sflag, size = 0x4, scoped, tag = 'scoped memory for tpu_custom_call.1']
    #allocation6 [shape = 'u8[2048]{0}', space=vmem, size = 0x800, scoped, tag = 'input window, operand 1, single buffered']
    #allocation7 [shape = 'u8[2048]{0}', space=vmem, size = 0x800, scoped, tag = 'output window, operand 0, single buffered']
    %7 = vsyncpa [#allocation5], 0
    %8 = vsyncpa [#allocation3], 0
    %9 = vsyncpa [#allocation4], 0
    // Predicated region
    $region2: #{tpu_custom_call.1} parent=1 // pred_check
      _
    $region3: #{tpu_custom_call.1} parent=1 // pred_check_branch
      %11 = sbr.rel (0) target = $region5
    $region4: #{tpu_custom_call.1} parent=1 // pred_region
      %s13 = ssub.s32 16, 16
      %14 = vsyncadd [#allocation5], %s13
      %17 = dma.hbm_to_smem %s0, 16, [#allocation2], [#allocation5]
    $region5: #{tpu_custom_call.1} parent=1 // pred_fallthru
      _
    // Predicated region
    $region6: #{tpu_custom_call.1} parent=1 // pred_check
      _
    $region7: #{tpu_custom_call.1} parent=1 // pred_check_branch
      %19 = sbr.rel (0) target = $region9
    $region8: #{tpu_custom_call.1} parent=1 // pred_region
      %s21 = ssub.s32 64, 64
      %22 = vsyncadd [#allocation3], %s21
      %s24 = sshll.u32 [#allocation6], 4
      %s25 = int_to_ptr.vmem [resolvable:$true] %s24
      %27 = dma.hbm_to_vmem [thread:$0]  %s1, 64, %s25, [#allocation3]
    $region9: #{tpu_custom_call.1} parent=1 // pred_fallthru
      _
    // Predicated region
    $region10: #{tpu_custom_call.1} parent=1 // pred_check
      _
    $region11: #{tpu_custom_call.1} parent=1 // pred_check_branch
      %29 = sbr.rel (0) target = $region13
    $region12: #{tpu_custom_call.1} parent=1 // pred_region
      %30 = dma.done [#allocation5], 16
    $region13: #{tpu_custom_call.1} parent=1 // pred_fallthru
      _
    // Predicated region
    $region14: #{tpu_custom_call.1} parent=1 // pred_check
      _
    $region15: #{tpu_custom_call.1} parent=1 // pred_check_branch
      %32 = sbr.rel (0) target = $region17
    $region16: #{tpu_custom_call.1} parent=1 // pred_region
      %33 = dma.done [#allocation3], 64
    $region17: #{tpu_custom_call.1} parent=1 // pred_fallthru
      _
    %34 = sfence
    %v35 = vld [vmem:[#allocation6] sm:$0x7]
    %37 = vrot.lane.b32.xlu0 %v35, 122
    %v38 = vpop.permute.xlu0 %37
    %v40 = vadd.f32 %v35, %v38
    %41 = vrot.lane.b32.xlu0 %v35, 116
    %v42 = vpop.permute.xlu0 %41
    %v44 = vadd.f32 %v40, %v42
    %s45 = sld [smem:[#allocation2]]
    %s46 = sld [smem:[#allocation2 + $0x4]]
    %s47 = sadd.f32 %s45, %s46
    %v48 = vstv %s47
    %v49 = vmul.f32 %v44, %v48
    %s50 = sld [smem:[#allocation2 + $0x1]]
    %s51 = sld [smem:[#allocation2 + $0x5]]
    %s52 = sadd.f32 %s50, %s51
    %v53 = vstv %s52
    %v54 = vmul.f32 %v44, %v53
    %56 = vrot.lane.b32.xlu0 %v54, 125
    %v57 = vpop.permute.xlu0 %56
    %v59 = vadd.f32 %v49, %v57
    %s60 = sld [smem:[#allocation2 + $0x2]]
    %s61 = sld [smem:[#allocation2 + $0x6]]
    %s62 = sadd.f32 %s60, %s61
    %v63 = vstv %s62
    %v64 = vmul.f32 %v44, %v63
    %66 = vrot.lane.b32.xlu0 %v64, 110
    %v67 = vpop.permute.xlu0 %66
    %v69 = vadd.f32 %v59, %v67
    %s70 = sld [smem:[#allocation2 + $0x3]]
    %s71 = sld [smem:[#allocation2 + $0x7]]
    %s72 = sadd.f32 %s70, %s71
    %v73 = vstv %s72
    %v74 = vmul.f32 %v44, %v73
    %76 = vrot.lane.b32.xlu0 %v74, 107
    %v77 = vpop.permute.xlu0 %76
    %v79 = vadd.f32 %v69, %v77
    %vm80 = vcmask 18432
    %81 = vst.msk [vmem:[#allocation7] sm:$0x7] %vm80, %v79
    // Predicated region
    $region18: #{tpu_custom_call.1} parent=1 // pred_check
      _
    $region19: #{tpu_custom_call.1} parent=1 // pred_check_branch
      %83 = sbr.rel (0) target = $region21
    $region20: #{tpu_custom_call.1} parent=1 // pred_region
      %s85 = ssub.s32 64, 64
      %86 = vsyncadd [#allocation4], %s85
      %s88 = sshll.u32 [#allocation7], 4
      %s89 = int_to_ptr.vmem [resolvable:$true] %s88
      %91 = dma.vmem_to_hbm [thread:$0]  %s89, 64, %s2, [#allocation4]
    $region21: #{tpu_custom_call.1} parent=1 // pred_fallthru
      _
    // Predicated region
    $region22: #{tpu_custom_call.1} parent=1 // pred_check
      _
    $region23: #{tpu_custom_call.1} parent=1 // pred_check_branch
      %93 = sbr.rel (0) target = $region25
    $region24: #{tpu_custom_call.1} parent=1 // pred_region
      %94 = dma.done [#allocation4], 64
    $region25: #{tpu_custom_call.1} parent=1 // pred_fallthru
      _
    %95 = vsyncpa [#allocation3], 1
    %96 = vsyncpa [#allocation4], 1
    %97 = vsyncpa [#allocation5], 1

</llo_original>
